<compile_context>
chip_gen: v7x
topology: tpu7x:2x2x1
jax: 0.10.0
libtpu: 0.0.40
codegen_flags: <defaults>
</compile_context>

<pallas_src>
import jax
import jax.numpy as jnp
from jax.experimental import pallas as pl
from jax.experimental.pallas import tpu as pltpu


def _round_up(x: int, m: int) -> int:
    return (x + m - 1) // m * m


def _choose_tile_b(B: int, *, min_tile: int = 128, max_tile: int = 2048,
                   target_steps: int = 4) -> int:
    """Batch tile: multiple of 16, >= target_steps grid steps when B allows,
    small over-padding, capped so VMEM stays comfortable on v5e."""
    if B <= min_tile:
        return _round_up(max(B, 1), 16)
    n_tiles = max(target_steps, -(-B // max_tile))          # cdiv
    tile = _round_up(-(-B // n_tiles), 16)                   # cdiv, round to 16
    return max(min_tile, min(tile, max_tile))


def mlp_kernel(x_ref, w1_ref, b1_ref, w2_ref, b2_ref, o_ref):
    # x_ref:  [TILE_B, D_in] f32   (batch tile, streamed per grid step)
    # w1_ref: [D_in, H]      bf16  (resident across grid steps)
    # b1_ref: [1, H]         f32   (resident)
    # w2_ref: [H, D_out]     bf16  (resident)
    # b2_ref: [1, D_out]     f32   (resident)
    # o_ref:  [TILE_B, D_out] f32
    x = x_ref[...].astype(jnp.bfloat16)
    h = jnp.dot(x, w1_ref[...], preferred_element_type=jnp.float32)
    h = jnp.maximum(h + b1_ref[...], 0.0)                    # bias + ReLU in f32 (VPU)
    y = jnp.dot(h.astype(jnp.bfloat16), w2_ref[...],
                preferred_element_type=jnp.float32)
    o_ref[...] = y + b2_ref[...]


def prepare_params(w1, b1, w2, b2):
    """One-time (outside the forward path) cast of the Linear parameters.

    w1: [D_in, H], b1: [H] or [1, H], w2: [H, D_out], b2: [D_out] or [1, D_out].
    Returns bf16 weights and f32 row-vector biases ready for the kernel.
    """
    w1_k = jnp.asarray(w1, jnp.bfloat16)
    w2_k = jnp.asarray(w2, jnp.bfloat16)
    b1_k = jnp.asarray(b1, jnp.float32).reshape(1, -1)
    b2_k = jnp.asarray(b2, jnp.float32).reshape(1, -1)
    return w1_k, b1_k, w2_k, b2_k


def mlp_forward(x, w1_k, b1_k, w2_k, b2_k):
    """Forward pass. x: [B, D_in] f32; params from prepare_params()."""
    B, d_in = x.shape
    h_dim = w1_k.shape[1]
    d_out = w2_k.shape[1]

    tile_b = _choose_tile_b(B)
    b_p = _round_up(B, tile_b)
    grid = (b_p // tile_b,)

    # Pad only batch rows (if needed). Padded rows compute garbage logits that
    # are sliced off below; cheap (64 B/row) and keeps block shapes static.
    x_in = x if b_p == B else jnp.pad(x, ((0, b_p - B), (0, 0)))

    out_p = pl.pallas_call(
        mlp_kernel,
        out_shape=jax.ShapeDtypeStruct((b_p, d_out), jnp.float32),
        grid_spec=pltpu.PrefetchScalarGridSpec(
            num_scalar_prefetch=0,
            grid=grid,
            in_specs=[
                # x: one batch tile per grid step (double-buffered by Pallas).
                # Last block dim == full array dim -> legal without 128-padding.
                pl.BlockSpec((tile_b, d_in), lambda i: (i, 0)),
                # Weights / biases: resident in VMEM across all grid steps.
                pl.BlockSpec((d_in, h_dim), lambda i: (0, 0)),
                pl.BlockSpec((1, h_dim), lambda i: (0, 0)),
                pl.BlockSpec((h_dim, d_out), lambda i: (0, 0)),
                pl.BlockSpec((1, d_out), lambda i: (0, 0)),
            ],
            # Unpadded output block (last dim == full array dim): ~12 B/row
            # writeback instead of a 512 B/row padded f32 slab.
            out_specs=pl.BlockSpec((tile_b, d_out), lambda i: (i, 0)),
        ),
        compiler_params=pltpu.CompilerParams(
            # Batch tiles are independent -> shard across TensorCores (v7x).
            dimension_semantics=("parallel",),
        ),
    )(x_in, w1_k, b1_k, w2_k, b2_k)

    return out_p if b_p == B else out_p[:B]


def init_params(key, input_size, hidden_size, output_size):
    """Deterministic init mimicking torch.nn.Linear default
    (U[-1/sqrt(fan_in), 1/sqrt(fan_in)]), stored transposed ([in, out])."""
    k1, k2, k3, k4 = jax.random.split(key, 4)
    bound1 = 1.0 / jnp.sqrt(jnp.float32(input_size))
    bound2 = 1.0 / jnp.sqrt(jnp.float32(hidden_size))
    w1 = jax.random.uniform(k1, (input_size, hidden_size), jnp.float32, -bound1, bound1)
    b1 = jax.random.uniform(k2, (1, hidden_size), jnp.float32, -bound1, bound1)
    w2 = jax.random.uniform(k3, (hidden_size, output_size), jnp.float32, -bound2, bound2)
    b2 = jax.random.uniform(k4, (1, output_size), jnp.float32, -bound2, bound2)
    return w1, b1, w2, b2


if __name__ == "__main__":
    # Small shapes consistent with the module: batch=8, input_size=16,
    # hidden_size=64, output_size=3 (multinomial classification logits).
    batch, input_size, hidden_size, output_size = 8, 16, 64, 3

    key = jax.random.PRNGKey(0)
    kx, kp = jax.random.split(key)
    x = jax.random.normal(kx, (batch, input_size), jnp.float32)
    w1, b1, w2, b2 = init_params(kp, input_size, hidden_size, output_size)

    # One-time parameter preparation (outside the per-call path).
    w1_k, b1_k, w2_k, b2_k = prepare_params(w1, b1, w2, b2)

    out = mlp_forward(x, w1_k, b1_k, w2_k, b2_k)
    out = jax.block_until_ready(out)

    # Pure-JAX f32 reference of the forward semantics. Tolerance accounts for
    # the bf16 MXU operands (f32 accumulation) used inside the kernel.
    ref = jnp.maximum(x @ w1 + b1, 0.0) @ w2 + b2
    assert out.shape == (batch, output_size), out.shape
    assert jnp.allclose(out, ref, atol=3e-2, rtol=3e-2), float(jnp.max(jnp.abs(out - ref)))

    print("KERNEL_OK")
</pallas_src>

<mosaic_0001>
module attributes {stable_mosaic.version = 11 : i64} {
  func.func @mlp_kernel(%arg0: i32, %arg1: memref<16x16xf32, #tpu.memory_space<vmem>>, %arg2: memref<16x64xbf16, #tpu.memory_space<vmem>>, %arg3: memref<1x64xf32, #tpu.memory_space<vmem>>, %arg4: memref<64x3xbf16, #tpu.memory_space<vmem>>, %arg5: memref<1x3xf32, #tpu.memory_space<vmem>>, %arg6: memref<16x3xf32, #tpu.memory_space<vmem>>) attributes {dimension_semantics = [#tpu.dimension_semantics<parallel>], iteration_bounds = array<i64: 1>, scalar_prefetch = 0 : i64, scratch_operands = 0 : i64, tpu.core_type = #tpu.core_type<tc>, window_params = [{transform_indices = @transform_0, window_bounds = array<i64: 16, 16>}, {pipeline_mode = #tpu.pipeline_mode<synchronous>, transform_indices = @transform_1, window_bounds = array<i64: 16, 64>}, {pipeline_mode = #tpu.pipeline_mode<synchronous>, transform_indices = @transform_2, window_bounds = array<i64: 1, 64>}, {pipeline_mode = #tpu.pipeline_mode<synchronous>, transform_indices = @transform_3, window_bounds = array<i64: 64, 3>}, {pipeline_mode = #tpu.pipeline_mode<synchronous>, transform_indices = @transform_4, window_bounds = array<i64: 1, 3>}, {transform_indices = @transform_5, window_bounds = array<i64: 16, 3>}]} {
    %c0 = arith.constant 0 : index
    %c0_0 = arith.constant 0 : index
    %0 = vector.load %arg1[%c0, %c0_0] : memref<16x16xf32, #tpu.memory_space<vmem>>, vector<16x16xf32>
    %1 = arith.truncf %0 : vector<16x16xf32> to vector<16x16xbf16>
    %c0_1 = arith.constant 0 : index
    %c0_2 = arith.constant 0 : index
    %2 = vector.load %arg2[%c0_1, %c0_2] : memref<16x64xbf16, #tpu.memory_space<vmem>>, vector<16x64xbf16>
    %cst = arith.constant dense<0.000000e+00> : vector<16x64xf32>
    %3 = tpu.matmul %1, %2, %cst {dimension_numbers = #tpu.dot_dimension_numbers<[1], [0], [0], [1], [0, 0, 1, 1], [], []>} : vector<16x16xbf16>, vector<16x64xbf16>, vector<16x64xf32> -> vector<16x64xf32>
    %c0_3 = arith.constant 0 : index
    %c0_4 = arith.constant 0 : index
    %4 = vector.load %arg3[%c0_3, %c0_4] : memref<1x64xf32, #tpu.memory_space<vmem>>, vector<1x64xf32>
    %5 = vector.broadcast %4 : vector<1x64xf32> to vector<16x64xf32>
    %6 = arith.addf %3, %5 : vector<16x64xf32>
    %cst_5 = arith.constant 0.000000e+00 : f32
    %7 = vector.broadcast %cst_5 : f32 to vector<16x64xf32>
    %8 = arith.maximumf %6, %7 : vector<16x64xf32>
    %9 = arith.truncf %8 : vector<16x64xf32> to vector<16x64xbf16>
    %c0_6 = arith.constant 0 : index
    %c0_7 = arith.constant 0 : index
    %10 = vector.load %arg4[%c0_6, %c0_7] : memref<64x3xbf16, #tpu.memory_space<vmem>>, vector<64x3xbf16>
    %cst_8 = arith.constant dense<0.000000e+00> : vector<16x3xf32>
    %11 = tpu.matmul %9, %10, %cst_8 {dimension_numbers = #tpu.dot_dimension_numbers<[1], [0], [0], [1], [0, 0, 1, 1], [], []>} : vector<16x64xbf16>, vector<64x3xbf16>, vector<16x3xf32> -> vector<16x3xf32>
    %c0_9 = arith.constant 0 : index
    %c0_10 = arith.constant 0 : index
    %12 = vector.load %arg5[%c0_9, %c0_10] : memref<1x3xf32, #tpu.memory_space<vmem>>, vector<1x3xf32>
    %13 = vector.broadcast %12 : vector<1x3xf32> to vector<16x3xf32>
    %14 = arith.addf %11, %13 : vector<16x3xf32>
    %c0_11 = arith.constant 0 : index
    %c0_12 = arith.constant 0 : index
    %15 = vector.load %arg6[%c0_11, %c0_12] : memref<16x3xf32, #tpu.memory_space<vmem>>, vector<16x3xf32>
    tpu.vector_store %arg6[%c0_11, %c0_12], %14 {strides = array<i32>} : memref<16x3xf32, #tpu.memory_space<vmem>>, vector<16x3xf32>,
    return
  }
  func.func @transform_0(%arg0: i32) -> (i32, i32) {
    %c0_i32 = arith.constant 0 : i32
    %c0_i32_0 = arith.constant 0 : i32
    return %arg0, %c0_i32 : i32, i32
  }
  func.func @transform_1(%arg0: i32) -> (i32, i32) {
    %c0_i32 = arith.constant 0 : i32
    %c0_i32_0 = arith.constant 0 : i32
    %c0_i32_1 = arith.constant 0 : i32
    return %c0_i32, %c0_i32_0 : i32, i32
  }
  func.func @transform_2(%arg0: i32) -> (i32, i32) {
    %c0_i32 = arith.constant 0 : i32
    %c0_i32_0 = arith.constant 0 : i32
    %c0_i32_1 = arith.constant 0 : i32
    return %c0_i32, %c0_i32_0 : i32, i32
  }
  func.func @transform_3(%arg0: i32) -> (i32, i32) {
    %c0_i32 = arith.constant 0 : i32
    %c0_i32_0 = arith.constant 0 : i32
    %c0_i32_1 = arith.constant 0 : i32
    return %c0_i32, %c0_i32_0 : i32, i32
  }
  func.func @transform_4(%arg0: i32) -> (i32, i32) {
    %c0_i32 = arith.constant 0 : i32
    %c0_i32_0 = arith.constant 0 : i32
    %c0_i32_1 = arith.constant 0 : i32
    return %c0_i32, %c0_i32_0 : i32, i32
  }
  func.func @transform_5(%arg0: i32) -> (i32, i32) {
    %c0_i32 = arith.constant 0 : i32
    %c0_i32_0 = arith.constant 0 : i32
    return %arg0, %c0_i32 : i32, i32
  }
}

</mosaic_0001>

<llo_original>
// kernel: tpu_custom_call.1
$region0: #{tpu_custom_call.1}
  #allocation0 [shape = 'u32[]', space=smem, size = 0x4, offset = 0x4, fixed_abs, tag = 'smem constant byte address 0x4 - core index']
  #allocation1 [shape = 'u32[144,128]{1,0:T(1,128)}', space=vmem, size = 0x12000, scoped, tag = 'internal scratch']
  %s0 = inlined_call_operand.vmem [shape: f32[16,16], index: 0, kind: input, shape index: {}]
  %s1 = inlined_call_operand.vmem [shape: bf16[16,64], index: 1, kind: input, shape index: {}]
  %s2 = inlined_call_operand.vmem [shape: f32[1,64], index: 2, kind: input, shape index: {}]
  %s3 = inlined_call_operand.vmem [shape: bf16[64,3], index: 3, kind: input, shape index: {}]
  %s4 = inlined_call_operand.vmem [shape: f32[1,3], index: 4, kind: input, shape index: {}]
  %s5 = inlined_call_operand.vmem [shape: f32[16,3], index: 5, kind: output, shape index: {}]
  %s6 = sld [smem:[#allocation0]]
  $region30: #{tpu_custom_call.1} parent=0
    _
  %s8 = ssub.s32 1, %s6
  %s9 = scalar_select 0, %s8, %s6
  // Predicated region
  $region2: #{tpu_custom_call.1} parent=0 // pred_check
    _
  $region3: #{tpu_custom_call.1} parent=0 // pred_check_branch
    %11 = sbr.rel (0) target = $region5
  $region4: #{tpu_custom_call.1} parent=0 // pred_region
    _
  $region5: #{tpu_custom_call.1} parent=0 // pred_fallthru
    _
  // Predicated region
  $region6: #{tpu_custom_call.1} parent=0 // pred_check
    _
  $region7: #{tpu_custom_call.1} parent=0 // pred_check_branch
    %13 = sbr.rel (0) target = $region9
  $region8: #{tpu_custom_call.1} parent=0 // pred_region
    _
  $region9: #{tpu_custom_call.1} parent=0 // pred_fallthru
    _
  // Predicated region
  $region10: #{tpu_custom_call.1} parent=0 // pred_check
    _
  $region11: #{tpu_custom_call.1} parent=0 // pred_check_branch
    %15 = sbr.rel (0) target = $region13
  $region12: #{tpu_custom_call.1} parent=0 // pred_region
    _
  $region13: #{tpu_custom_call.1} parent=0 // pred_fallthru
    _
  // Predicated region
  $region14: #{tpu_custom_call.1} parent=0 // pred_check
    _
  $region15: #{tpu_custom_call.1} parent=0 // pred_check_branch
    %17 = sbr.rel (0) target = $region17
  $region16: #{tpu_custom_call.1} parent=0 // pred_region
    _
  $region17: #{tpu_custom_call.1} parent=0 // pred_fallthru
    _
  // Predicated region
  $region18: #{tpu_custom_call.1} parent=0 // pred_check
    _
  $region19: #{tpu_custom_call.1} parent=0 // pred_check_branch
    %19 = sbr.rel (0) target = $region21
  $region20: #{tpu_custom_call.1} parent=0 // pred_region
    _
  $region21: #{tpu_custom_call.1} parent=0 // pred_fallthru
    _
  %v21 = vld [vmem:[%s0] sm:$0xff]
  %v22 = vld [vmem:[%s0 + $0x8] sm:$0xff]
  %v23 = vpack.c.bf16 %v22, %v21
  %v24 = vld [vmem:[%s1] sm:$0xf]
  %v25 = vld [vmem:[%s1 + $0x4] sm:$0xf]
  %v26 = vld [vmem:[%s2] sm:$0x1]
  %v28 = vlaneseq
  %v29 = vshrl.u32 %v28, 7
  %v30 = vsub.s32 0, %v29
  %v31 = vrot.slane %v26, %v30
  %v35 = vunpack.c.l.b16 %v24
  %v36 = vunpack.c.l.b16 %v25
  %v37 = vpack.c.b16 %v36, %v35
  %vm39 = vcmask 130048
  %v41 = vsel %vm39, %v23, 0
  %43 = vmatprep.subr.bf16.mxu0 0
  %44 = vmatpush1.bf16.msra.mxu0 %v37
  %45 = vmatprep.subr.bf16.mxu0 0
  %46 = vmatpush1.bf16.msra.mxu0 0
  %47 = vmatprep.subr.bf16.mxu0 0
  %48 = vmatpush1.bf16.msra.mxu0 0
  %49 = vmatprep.subr.bf16.mxu0 0
  %50 = vmatpush1.bf16.msra.mxu0 0
  %51 = vmatprep.subr.bf16.mxu0 0
  %52 = vmatpush1.bf16.msra.mxu0 0
  %53 = vmatprep.subr.bf16.mxu0 0
  %54 = vmatpush1.bf16.msra.mxu0 0
  %55 = vmatprep.subr.bf16.mxu0 0
  %56 = vmatpush1.bf16.msra.mxu0 0
  %57 = vmatprep.subr.bf16.mxu0 0
  %58 = vmatpush1.bf16.msra.mxu0 0
  %59 = vmatprep.subr.bf16.mxu0 0
  %60 = vmatpush1.bf16.msra.mxu0 0
  %61 = vmatprep.subr.bf16.mxu0 0
  %62 = vmatpush1.bf16.msra.mxu0 0
  %63 = vmatprep.subr.bf16.mxu0 0
  %64 = vmatpush1.bf16.msra.mxu0 0
  %65 = vmatprep.subr.bf16.mxu0 0
  %66 = vmatpush1.bf16.msra.mxu0 0
  %67 = vmatprep.subr.bf16.mxu0 0
  %68 = vmatpush1.bf16.msra.mxu0 0
  %69 = vmatprep.subr.bf16.mxu0 0
  %70 = vmatpush1.bf16.msra.mxu0 0
  %71 = vmatprep.subr.bf16.mxu0 0
  %72 = vmatpush1.bf16.msra.mxu0 0
  %73 = vmatprep.subr.bf16.mxu0 0
  %74 = vmatpush1.bf16.msra.mxu0 0
  %75 = vmatprep.mubr.bf16.mxu0 0
  %76 = vmatmul.mubr.bf16.gmra.mrb[0].mxu0 %v41
  %v77 = vpop.f32.mrb[0].mxu0
  %v78 = vadd.f32 %v31, %v77
  %v79 = vpop.f32.mrb[0].mxu0
  %v80 = vpop.f32.mrb[0].mxu0
  %v81 = vadd.f32 %v31, %v80
  %v82 = vpop.f32.mrb[0].mxu0
  %83 = vdwg.mxu0
  %v84 = vmax.f32 %v78, 0.0
  %v85 = vmax.f32 %v81, 0.0
  %v86 = vpack.c.bf16 %v85, %v84
  %v87 = vld [vmem:[%s3] sm:$0xf]
  %v88 = vld [vmem:[%s3 + $0x4] sm:$0xf]
  %v89 = vld [vmem:[%s3 + $0x8] sm:$0xf]
  %v90 = vld [vmem:[%s3 + $0xc] sm:$0xf]
  %v91 = vld [vmem:[%s3 + $0x10] sm:$0xf]
  %v92 = vld [vmem:[%s3 + $0x14] sm:$0xf]
  %v93 = vld [vmem:[%s3 + $0x18] sm:$0xf]
  %v94 = vld [vmem:[%s3 + $0x1c] sm:$0xf]
  %v95 = vld [vmem:[%s4] sm:$0x1]
  %v97 = vlaneseq
  %v98 = vshrl.u32 %v97, 7
  %v99 = vsub.s32 0, %v98
  %v100 = vrot.slane %v95, %v99
  %v110 = vunpack.c.l.b16 %v87
  %v111 = vunpack.c.l.b16 %v88
  %v112 = vunpack.c.l.b16 %v89
  %v113 = vunpack.c.l.b16 %v90
  %v114 = vunpack.c.l.b16 %v91
  %v115 = vunpack.c.l.b16 %v92
  %v116 = vunpack.c.l.b16 %v93
  %v117 = vunpack.c.l.b16 %v94
  %v118 = vpack.c.b16 %v111, %v110
  %v119 = vpack.c.b16 %v113, %v112
  %v120 = vpack.c.b16 %v115, %v114
  %v121 = vpack.c.b16 %v117, %v116
  %vm126 = vcmask 523264
  %v128 = vsel %vm126, %v86, 0
  %130 = vmatprep.subr.bf16.mxu0 0
  %131 = vmatpush1.bf16.msra.mxu0 %v118
  %132 = vmatprep.subr.bf16.mxu0 0
  %133 = vmatpush1.bf16.msra.mxu0 %v119
  %134 = vmatprep.subr.bf16.mxu0 0
  %135 = vmatpush1.bf16.msra.mxu0 %v120
  %136 = vmatprep.subr.bf16.mxu0 0
  %137 = vmatpush1.bf16.msra.mxu0 %v121
  %138 = vmatprep.subr.bf16.mxu0 0
  %139 = vmatpush1.bf16.msra.mxu0 0
  %140 = vmatprep.subr.bf16.mxu0 0
  %141 = vmatpush1.bf16.msra.mxu0 0
  %142 = vmatprep.subr.bf16.mxu0 0
  %143 = vmatpush1.bf16.msra.mxu0 0
  %144 = vmatprep.subr.bf16.mxu0 0
  %145 = vmatpush1.bf16.msra.mxu0 0
  %146 = vmatprep.subr.bf16.mxu0 0
  %147 = vmatpush1.bf16.msra.mxu0 0
  %148 = vmatprep.subr.bf16.mxu0 0
  %149 = vmatpush1.bf16.msra.mxu0 0
  %150 = vmatprep.subr.bf16.mxu0 0
  %151 = vmatpush1.bf16.msra.mxu0 0
  %152 = vmatprep.subr.bf16.mxu0 0
  %153 = vmatpush1.bf16.msra.mxu0 0
  %154 = vmatprep.subr.bf16.mxu0 0
  %155 = vmatpush1.bf16.msra.mxu0 0
  %156 = vmatprep.subr.bf16.mxu0 0
  %157 = vmatpush1.bf16.msra.mxu0 0
  %158 = vmatprep.subr.bf16.mxu0 0
  %159 = vmatpush1.bf16.msra.mxu0 0
  %160 = vmatprep.subr.bf16.mxu0 0
  %161 = vmatpush1.bf16.msra.mxu0 0
  %162 = vmatprep.mubr.bf16.mxu0 0
  %163 = vmatmul.mubr.bf16.gmra.mrb[0].mxu0 %v128
  %v164 = vpop.f32.mrb[0].mxu0
  %v165 = vadd.f32 %v100, %v164
  %v166 = vpop.f32.mrb[0].mxu0
  %v167 = vpop.f32.mrb[0].mxu0
  %v168 = vadd.f32 %v100, %v167
  %v169 = vpop.f32.mrb[0].mxu0
  %170 = vdwg.mxu0
  %vm171 = vcmask 23552
  %172 = vst.msk [vmem:[%s5] sm:$0xff] %vm171, %v165
  %173 = vst.msk [vmem:[%s5 + $0x8] sm:$0xff] %vm171, %v168
  // Predicated region
  $region22: #{tpu_custom_call.1} parent=0 // pred_check
    _
  $region23: #{tpu_custom_call.1} parent=0 // pred_check_branch
    %175 = sbr.rel (0) target = $region25
  $region24: #{tpu_custom_call.1} parent=0 // pred_region
    _
  $region25: #{tpu_custom_call.1} parent=0 // pred_fallthru
    _
  // Predicated region
  $region26: #{tpu_custom_call.1} parent=0 // pred_check
    _
  $region27: #{tpu_custom_call.1} parent=0 // pred_check_branch
    %177 = sbr.rel (0) target = $region29
  $region28: #{tpu_custom_call.1} parent=0 // pred_region
    _
  $region29: #{tpu_custom_call.1} parent=0 // pred_fallthru
    _

</llo_original>
